<compile_context>
chip_gen: v5e
topology: v5e:2x2
jax: 0.10.0
libtpu: 0.0.40
codegen_flags: <defaults>
</compile_context>

<pallas_src>
import jax
import jax.numpy as jnp
from jax.experimental import pallas as pl
from jax.experimental.pallas import tpu as pltpu

LANE = 128
SUBLANE = 8
_MAX_LANE_WIDTH = 4096                      # widest last dim we consider
_TARGET_BLOCK_BYTES = 6 * 1024 * 1024       # ~6 MiB input tile (v7x roofline)
_VMEM_LIMIT_BYTES = 48 * 1024 * 1024        # explicit scoped-VMEM limit
_MIN_SPLIT_BYTES = 1 * 1024 * 1024          # split into >=2 blocks above this


def _swish_kernel(beta_ref, x_ref, o_ref):
    # beta_ref: scalar-prefetched SMEM ref, shape (1,), float32
    # x_ref / o_ref: VMEM tiles (tile_rows, lane_width)
    x = x_ref[...].astype(jnp.float32)          # compute in f32; free (mem-bound)
    beta = beta_ref[0]                          # f32 scalar from SMEM
    sig = jax.nn.sigmoid(beta * x)              # logistic -> EUP path
    o_ref[...] = (x * sig).astype(o_ref.dtype)


def _sublane_multiple(dtype):
    """Native sublane packing: 8 rows for 32-bit, 16 for 16-bit, 32 for 8-bit."""
    itemsize = jnp.dtype(dtype).itemsize
    return max(SUBLANE, SUBLANE * (4 // max(itemsize, 1)))


def _choose_lane_width(n_main):
    """Widest multiple of 128 (<= _MAX_LANE_WIDTH) that divides n_main exactly."""
    q = n_main // LANE
    best = 1
    for d in range(1, min(q, _MAX_LANE_WIDTH // LANE) + 1):
        if q % d == 0:
            best = d
    return best * LANE


@jax.jit
def swish_pallas(x, beta):
    """x: arbitrary-shape float array (e.g. NCHW). beta: scalar (cast to f32)."""
    orig_shape = x.shape
    orig_dtype = x.dtype

    flat = x.reshape(-1)
    n = flat.shape[0]
    elem_bytes = jnp.dtype(orig_dtype).itemsize
    beta_f32 = jnp.asarray(beta, dtype=jnp.float32)

    # 128-aligned prefix goes through the kernel; the <128-element tail is
    # handled in plain jnp (no whole-array pad/concatenate on the input side).
    n_main = (n // LANE) * LANE
    tail = n - n_main

    if n_main == 0:
        xf = flat.astype(jnp.float32)
        out = (xf * jax.nn.sigmoid(beta_f32 * xf)).astype(orig_dtype)
        return out.reshape(orig_shape)

    w = _choose_lane_width(n_main)
    rows = n_main // w
    x2d = flat[:n_main].reshape(rows, w)

    sub = _sublane_multiple(orig_dtype)
    total_bytes = rows * w * elem_bytes

    # Rows per block so each input tile is ~_TARGET_BLOCK_BYTES, rounded to the
    # dtype-native sublane multiple.
    rows_per_block = max(sub, (_TARGET_BLOCK_BYTES // (w * elem_bytes)) // sub * sub)

    if rows > rows_per_block:
        tile_rows = rows_per_block
    elif total_bytes >= _MIN_SPLIT_BYTES and rows >= 2 * sub:
        # Force >= 2 grid steps so both v7x TensorCores get work
        # (harmless no-op on single-core v5e/v6e).
        half = (rows + 1) // 2
        tile_rows = min(((half + sub - 1) // sub) * sub, rows)
    else:
        tile_rows = rows          # full-extent block (exempt from 8-row rule)

    grid = ((rows + tile_rows - 1) // tile_rows,)   # partial last block is masked
    beta_arr = beta_f32.reshape((1,))

    out2d = pl.pallas_call(
        _swish_kernel,
        out_shape=jax.ShapeDtypeStruct((rows, w), orig_dtype),
        grid_spec=pltpu.PrefetchScalarGridSpec(
            num_scalar_prefetch=1,  # beta lives in SMEM before the grid runs
            grid=grid,
            in_specs=[pl.BlockSpec((tile_rows, w), lambda i, beta_ref: (i, 0))],
            out_specs=pl.BlockSpec((tile_rows, w), lambda i, beta_ref: (i, 0)),
        ),
        compiler_params=pltpu.CompilerParams(
            # "parallel" lets the grid shard across v7x's two TensorCores.
            dimension_semantics=("parallel",),
            vmem_limit_bytes=_VMEM_LIMIT_BYTES,
        ),
        # TODO(synk): callers that can consume the activation in place could add
        # input_output_aliases={1: 0}; omitted so x stays valid post-call.
        # TODO(synk): if xprof shows exposed DMA on v7x, add
        # pipeline_mode=pl.Buffered(3) to the in/out BlockSpecs.
    )(beta_arr, x2d)

    out_main = out2d.reshape(-1)
    if tail:
        xt = flat[n_main:].astype(jnp.float32)
        out_tail = (xt * jax.nn.sigmoid(beta_f32 * xt)).astype(orig_dtype)
        # Only the output assembly copies; swish(0)=0 is irrelevant here since
        # we never pad the input.
        out_flat = jnp.concatenate([out_main, out_tail])
    else:
        out_flat = out_main
    return out_flat.reshape(orig_shape)


if __name__ == "__main__":
    key = jax.random.PRNGKey(0)
    # NCHW input consistent with typical conv-net usage of Swish.
    x = jax.random.normal(key, (2, 4, 16, 16), dtype=jnp.float32)

    # Deterministic parameter init matching nn.Parameter(torch.tensor(1.0)).
    beta = jnp.float32(1.0)

    out = jax.block_until_ready(swish_pallas(x, beta))
    ref = x * jax.nn.sigmoid(beta * x)
    assert out.shape == x.shape and out.dtype == x.dtype
    assert jnp.max(jnp.abs(out - ref)) < 1e-5

    # Non-128-aligned size exercises the prefix-kernel + jnp-tail path.
    x2 = jax.random.normal(jax.random.PRNGKey(1), (3, 5, 7, 11), dtype=jnp.float32)
    out2 = jax.block_until_ready(swish_pallas(x2, beta))
    ref2 = x2 * jax.nn.sigmoid(beta * x2)
    assert out2.shape == x2.shape
    assert jnp.max(jnp.abs(out2 - ref2)) < 1e-5

    # >=1 MiB input exercises the forced >=2-grid-step (two-TensorCore) path.
    x3 = jax.random.normal(jax.random.PRNGKey(2), (8, 32, 32, 32), dtype=jnp.float32)
    out3 = jax.block_until_ready(swish_pallas(x3, beta))
    ref3 = x3 * jax.nn.sigmoid(beta * x3)
    assert out3.shape == x3.shape
    assert jnp.max(jnp.abs(out3 - ref3)) < 1e-5

    print("KERNEL_OK")
</pallas_src>

<mosaic_0001>
module attributes {stable_mosaic.version = 11 : i64} {
  func.func @_swish_kernel(%arg0: i32, %arg1: memref<1xf32, #tpu.memory_space<smem>>, %arg2: memref<1x2048xf32, #tpu.memory_space<vmem>>, %arg3: memref<1x2048xf32, #tpu.memory_space<vmem>>) attributes {dimension_semantics = [#tpu.dimension_semantics<parallel>], iteration_bounds = array<i64: 1>, scalar_prefetch = 1 : i64, scratch_operands = 0 : i64, tpu.core_type = #tpu.core_type<tc>, window_params = [{transform_indices = @transform_0, window_bounds = array<i64: 1, 2048>}, {transform_indices = @transform_1, window_bounds = array<i64: 1, 2048>}]} {
    %c0 = arith.constant 0 : index
    %c0_0 = arith.constant 0 : index
    %0 = vector.load %arg2[%c0, %c0_0] : memref<1x2048xf32, #tpu.memory_space<vmem>>, vector<1x2048xf32>
    %c0_1 = arith.constant 0 : index
    %1 = memref.load %arg1[%c0_1] : memref<1xf32, #tpu.memory_space<smem>>
    %2 = vector.broadcast %1 : f32 to vector<1x2048xf32>
    %3 = arith.mulf %2, %0 : vector<1x2048xf32>
    %4 = arith.negf %3 : vector<1x2048xf32>
    %5 = math.exp %4 : vector<1x2048xf32>
    %cst = arith.constant 1.000000e+00 : f32
    %6 = vector.broadcast %cst : f32 to vector<1x2048xf32>
    %7 = arith.addf %6, %5 : vector<1x2048xf32>
    %8 = arith.divf %6, %7 : vector<1x2048xf32>
    %9 = arith.mulf %0, %8 : vector<1x2048xf32>
    %c0_2 = arith.constant 0 : index
    %c0_3 = arith.constant 0 : index
    %10 = vector.load %arg3[%c0_2, %c0_3] : memref<1x2048xf32, #tpu.memory_space<vmem>>, vector<1x2048xf32>
    tpu.vector_store %arg3[%c0_2, %c0_3], %9 {strides = array<i32>} : memref<1x2048xf32, #tpu.memory_space<vmem>>, vector<1x2048xf32>,
    return
  }
  func.func @transform_0(%arg0: i32, %arg1: memref<1xf32, #tpu.memory_space<smem>>) -> (i32, i32) {
    %c0_i32 = arith.constant 0 : i32
    %c0_i32_0 = arith.constant 0 : i32
    return %arg0, %c0_i32 : i32, i32
  }
  func.func @transform_1(%arg0: i32, %arg1: memref<1xf32, #tpu.memory_space<smem>>) -> (i32, i32) {
    %c0_i32 = arith.constant 0 : i32
    %c0_i32_0 = arith.constant 0 : i32
    return %arg0, %c0_i32 : i32, i32
  }
}

</mosaic_0001>

<llo_original>
// kernel: swish_pallas.1
$region0: #{swish_pallas.1}
  #allocation0 [shape = 'u32[]', space=smem, size = 0x4, offset = 0x4, fixed_abs, tag = 'smem constant byte address 0x4 - core index']
  #allocation1 [shape = 'u32[72,128]{1,0:T(1,128)}', space=vmem, size = 0x9000, scoped, tag = 'internal scratch']
  #allocation2 [shape = 's32[1]{0}', space=sflag, size = 0x4, scoped, tag = 'scoped memory for swish_pallas.1']
  #allocation3 [shape = 'f32[1]{0:T(128)S(6)}', space=smem, size = 0x200, scoped, tag = 'prefetched SMEM operand 0']
  %s0 = inlined_call_operand.<no memory space> [shape: f32[1], index: 0, kind: input, shape index: {}]
  %s1 = inlined_call_operand.vmem [shape: f32[1,2048], index: 1, kind: input, shape index: {}]
  %s2 = inlined_call_operand.vmem [shape: f32[1,2048], index: 2, kind: output, shape index: {}]
  %s3 = sld [smem:[#allocation0]]
  $region14: #{swish_pallas.1} parent=0
    _
  %s5 = ssub.s32 1, %s3
  %s6 = scalar_select 0, %s5, %s3
  %7 = sst [smem:[#allocation3]] %s0
  // Predicated region
  $region2: #{swish_pallas.1} parent=0 // pred_check
    _
  $region3: #{swish_pallas.1} parent=0 // pred_check_branch
    %9 = sbr.rel (0) target = $region5
  $region4: #{swish_pallas.1} parent=0 // pred_region
    _
  $region5: #{swish_pallas.1} parent=0 // pred_fallthru
    _
  %v10 = vld [vmem:[%s1] sm:$0xff]
  %v11 = vld [vmem:[%s1 + $0x8] sm:$0xff]
  %s12 = sld [smem:[#allocation3]]
  %v13 = vstv %s12
  %v14 = vmul.f32 %v13, %v10
  %v15 = vmul.f32 %v13, %v11
  %v16 = vxor.u32 %v14, 2147483648
  %v17 = vxor.u32 %v15, 2147483648
  %v18 = vmul.f32 %v16, 1.442695
  %v19 = vpow.pop %v18
  %v20 = vmul.f32 %v17, 1.442695
  %v21 = vpow.pop %v20
  %v22 = vadd.f32 %v19, 1.0
  %v23 = vadd.f32 %v21, 1.0
  %v24 = vrcp.pop %v22
  %v25 = vmul.f32 %v22, %v24
  %v26 = vsub.f32 1.0, %v25
  %v27 = vmul.f32 %v24, %v26
  %v28 = vadd.f32 %v24, %v27
  %vm29 = vweird.f32 %v22
  %vm30 = vweird.f32 %v24
  %vm31 = vmor %vm29, %vm30
  %v32 = vsel %vm31, %v24, %v28
  %v33 = vand.u32 2147483647, %v22
  %vm34 = vcmp.eq.f32.partialorder %v33, 8.507059e+37
  %v35 = vand.u32 %v22, 2147483648
  %v36 = vor.u32 1.1754944e-38, %v35
  %v37 = vsel %vm34, %v36, %v32
  %v38 = vmul.f32 1.0, %v37
  %v39 = vrcp.pop %v23
  %v40 = vmul.f32 %v23, %v39
  %v41 = vsub.f32 1.0, %v40
  %v42 = vmul.f32 %v39, %v41
  %v43 = vadd.f32 %v39, %v42
  %vm44 = vweird.f32 %v23
  %vm45 = vweird.f32 %v39
  %vm46 = vmor %vm44, %vm45
  %v47 = vsel %vm46, %v39, %v43
  %v48 = vand.u32 2147483647, %v23
  %vm49 = vcmp.eq.f32.partialorder %v48, 8.507059e+37
  %v50 = vand.u32 %v23, 2147483648
  %v51 = vor.u32 1.1754944e-38, %v50
  %v52 = vsel %vm49, %v51, %v47
  %v53 = vmul.f32 1.0, %v52
  %v54 = vmul.f32 %v10, %v38
  %v55 = vmul.f32 %v11, %v53
  %56 = vst [vmem:[%s2] sm:$0xff] %v54
  %57 = vst [vmem:[%s2 + $0x8] sm:$0xff] %v55
  // Predicated region
  $region6: #{swish_pallas.1} parent=0 // pred_check
    _
  $region7: #{swish_pallas.1} parent=0 // pred_check_branch
    %59 = sbr.rel (0) target = $region9
  $region8: #{swish_pallas.1} parent=0 // pred_region
    _
  $region9: #{swish_pallas.1} parent=0 // pred_fallthru
    _
  // Predicated region
  $region10: #{swish_pallas.1} parent=0 // pred_check
    _
  $region11: #{swish_pallas.1} parent=0 // pred_check_branch
    %61 = sbr.rel (0) target = $region13
  $region12: #{swish_pallas.1} parent=0 // pred_region
    _
  $region13: #{swish_pallas.1} parent=0 // pred_fallthru
    _

</llo_original>
